<compile_context>
chip_gen: v5e
topology: v5e:2x2
jax: 0.10.0
libtpu: 0.0.40
codegen_flags: <defaults>
</compile_context>

<pallas_src>
import functools

import jax
import jax.numpy as jnp
from jax.experimental import pallas as pl
from jax.experimental.pallas import tpu as pltpu


def _round_up(x, m):
    return ((x + m - 1) // m) * m


# ---------------------------------------------------------------------------
# Kernel 1: gumbel-softmax over (L, 2) head weights + the two group losses.
# 2*L elements total; runs once, independent of num_words.
# ---------------------------------------------------------------------------
def _lang_head_kernel(w_ref, g_ref, probs_ref, loss_ref, *, tau, loss_weight, min_tasks):
    logits = (w_ref[...] + g_ref[...]) * (1.0 / tau)                  # (L, 2)
    m = jnp.max(logits, axis=-1, keepdims=True)
    e = jnp.exp(logits - m)
    inv = pl.reciprocal(jnp.sum(e, axis=-1, keepdims=True), approx=False)
    probs = e * inv                                                   # (L, 2)
    probs_ref[...] = probs
    col_sums = jnp.sum(probs, axis=0, keepdims=True)                  # (1, 2)
    loss_ref[...] = loss_weight * jnp.maximum(min_tasks - col_sums, 0.0)


# ---------------------------------------------------------------------------
# Kernel 2: lane-dense contraction over L.
#   word_ref : (L, TILE_N) tile of word_lang_probs^T
#   probs_ref: (L, 2) lang_head_probs (same block every grid step)
#   out_ref  : (2, TILE_N) tile of word_head_probs^T
# VPU broadcast-FMAs + sublane reduction; no MXU involvement.
# ---------------------------------------------------------------------------
def _group_kernel(probs_ref, word_ref, out_ref):
    w = word_ref[...]                                                 # (L, TILE_N)
    p = probs_ref[...]                                                # (L, 2)
    out0 = jnp.sum(w * p[:, 0:1], axis=0, keepdims=True)              # (1, TILE_N)
    out1 = jnp.sum(w * p[:, 1:2], axis=0, keepdims=True)              # (1, TILE_N)
    out_ref[...] = jnp.concatenate([out0, out1], axis=0)              # (2, TILE_N)


def binary_language_grouper_forward(
    word_lang_probs,      # (N, L) float32
    lang_head_weights,    # (L, 2) float32
    gumbel_noise,         # (L, 2) float32, g = -log(-log(U))
    *,
    tau=1.0,
    loss_weight=1.0,
    min_tasks=1.0,
    max_tile_n=4096,      # lanes per tile; sized well under v7x's 64 MiB VMEM
):
    n_words, n_langs = word_lang_probs.shape

    # ---- (L, 2) gumbel-softmax + group losses: one tiny pallas_call ----
    head_kernel = functools.partial(
        _lang_head_kernel,
        tau=float(tau),
        loss_weight=float(loss_weight),
        min_tasks=float(min_tasks),
    )
    lang_head_probs, losses = pl.pallas_call(
        head_kernel,
        out_shape=(
            jax.ShapeDtypeStruct((n_langs, 2), jnp.float32),
            jax.ShapeDtypeStruct((1, 2), jnp.float32),
        ),
        in_specs=[
            pl.BlockSpec(memory_space=pltpu.MemorySpace.VMEM),
            pl.BlockSpec(memory_space=pltpu.MemorySpace.VMEM),
        ],
        out_specs=(
            pl.BlockSpec(memory_space=pltpu.MemorySpace.VMEM),
            pl.BlockSpec(memory_space=pltpu.MemorySpace.VMEM),
        ),
    )(lang_head_weights.astype(jnp.float32), gumbel_noise.astype(jnp.float32))

    # ---- layout plumbing in the wrapper: N goes to the lane dimension ----
    word_t = word_lang_probs.astype(jnp.float32).T                    # (L, N)
    tile_n = min(int(max_tile_n), _round_up(n_words, 128))
    n_pad = _round_up(n_words, tile_n)
    if n_pad != n_words:
        word_t = jnp.pad(word_t, ((0, 0), (0, n_pad - n_words)))
    grid = (n_pad // tile_n,)

    cost = pl.CostEstimate(
        flops=2 * n_pad * n_langs * 2,
        transcendentals=0,
        bytes_accessed=4 * (n_pad * n_langs + 2 * n_pad + 2 * n_langs),
    )

    out_t = pl.pallas_call(
        _group_kernel,
        out_shape=jax.ShapeDtypeStruct((2, n_pad), jnp.float32),
        grid=grid,
        in_specs=[
            pl.BlockSpec((n_langs, 2), lambda i: (0, 0)),             # same small block each step
            pl.BlockSpec((n_langs, tile_n), lambda i: (0, i)),        # lane-dense word tile
        ],
        out_specs=pl.BlockSpec((2, tile_n), lambda i: (0, i)),        # lane-dense output tile
        compiler_params=pltpu.CompilerParams(
            dimension_semantics=("parallel",),                        # megacore shard on v7x
            vmem_limit_bytes=32 * 1024 * 1024,                        # explicit, fits v7x 64 MiB
        ),
        cost_estimate=cost,
    )(lang_head_probs, word_t)

    word_head_probs = out_t[:, :n_words].T                            # (N, 2)
    losses_dict = {
        "loss_group_1": losses[0, 0],
        "loss_group_2": losses[0, 1],
    }
    return word_head_probs, losses_dict


def _reference_forward(word_lang_probs, lang_head_weights, gumbel_noise,
                       tau, loss_weight, min_tasks):
    logits = (lang_head_weights + gumbel_noise) / tau
    lang_head_probs = jax.nn.softmax(logits, axis=-1)
    word_head_probs = jnp.einsum(
        "nl,lk->nk", word_lang_probs, lang_head_probs,
        precision=jax.lax.Precision.HIGHEST,
    )
    l1 = loss_weight * jnp.maximum(min_tasks - jnp.sum(lang_head_probs[:, 0]), 0.0)
    l2 = loss_weight * jnp.maximum(min_tasks - jnp.sum(lang_head_probs[:, 1]), 0.0)
    return word_head_probs, l1, l2


if __name__ == "__main__":
    # Synthetic config (cfg.MODEL.LANGUAGE_HEAD.NUM_CLASSES etc.)
    num_languages = 8
    num_words = 200          # not a multiple of 128 -> exercises the pad/slice path
    tau = 1.0
    loss_weight = 1.0
    min_tasks = 1.0

    key = jax.random.PRNGKey(0)
    k_probs, k_gumbel = jax.random.split(key)

    # word_lang_probs: per-word language probability distribution (rows sum to 1).
    word_logits = jax.random.normal(k_probs, (num_words, num_languages), dtype=jnp.float32)
    word_lang_probs = jax.nn.softmax(word_logits, axis=-1)

    # Parameter init as in the module: nn.Parameter(torch.ones(num_languages, 2)).
    lang_head_weights = jnp.ones((num_languages, 2), dtype=jnp.float32)

    # Gumbel noise for F.gumbel_softmax: g = -log(-log(U)).
    # TODO(synk): torch's in-module RNG has no Pallas equivalent; noise is sampled here and passed in.
    u = jax.random.uniform(
        k_gumbel, (num_languages, 2), dtype=jnp.float32, minval=1e-6, maxval=1.0 - 1e-6
    )
    gumbel_noise = -jnp.log(-jnp.log(u))

    word_head_probs, losses = binary_language_grouper_forward(
        word_lang_probs, lang_head_weights, gumbel_noise,
        tau=tau, loss_weight=loss_weight, min_tasks=min_tasks,
    )
    jax.block_until_ready(word_head_probs)
    jax.block_until_ready(losses["loss_group_1"])
    jax.block_until_ready(losses["loss_group_2"])

    ref_out, ref_l1, ref_l2 = _reference_forward(
        word_lang_probs, lang_head_weights, gumbel_noise, tau, loss_weight, min_tasks
    )
    assert word_head_probs.shape == (num_words, 2)
    assert jnp.allclose(word_head_probs, ref_out, atol=1e-5, rtol=1e-5)
    assert jnp.allclose(losses["loss_group_1"], ref_l1, atol=1e-5, rtol=1e-5)
    assert jnp.allclose(losses["loss_group_2"], ref_l2, atol=1e-5, rtol=1e-5)

    print("KERNEL_OK")
</pallas_src>

<mosaic_0001>
module attributes {stable_mosaic.version = 11 : i64} {
  func.func @_lang_head_kernel(%arg0: memref<8x2xf32, #tpu.memory_space<vmem>>, %arg1: memref<8x2xf32, #tpu.memory_space<vmem>>, %arg2: memref<8x2xf32, #tpu.memory_space<vmem>>, %arg3: memref<1x2xf32, #tpu.memory_space<vmem>>) attributes {dimension_semantics = [], scalar_prefetch = 0 : i64, scratch_operands = 0 : i64, tpu.core_type = #tpu.core_type<tc>} {
    %c0 = arith.constant 0 : index
    %c0_0 = arith.constant 0 : index
    %0 = vector.load %arg0[%c0, %c0_0] : memref<8x2xf32, #tpu.memory_space<vmem>>, vector<8x2xf32>
    %c0_1 = arith.constant 0 : index
    %c0_2 = arith.constant 0 : index
    %1 = vector.load %arg1[%c0_1, %c0_2] : memref<8x2xf32, #tpu.memory_space<vmem>>, vector<8x2xf32>
    %2 = arith.addf %0, %1 : vector<8x2xf32>
    %cst = arith.constant 1.000000e+00 : f32
    %3 = vector.broadcast %cst : f32 to vector<8x2xf32>
    %4 = arith.mulf %2, %3 : vector<8x2xf32>
    %cst_3 = arith.constant dense<0xFF800000> : vector<8xf32>
    %5 = vector.multi_reduction <maximumf>, %4, %cst_3 [1] : vector<8x2xf32> to vector<8xf32>
    %6 = vector.shape_cast %5 : vector<8xf32> to vector<8x1xf32>
    %7 = vector.broadcast %6 : vector<8x1xf32> to vector<8x2xf32>
    %8 = arith.subf %4, %7 : vector<8x2xf32>
    %9 = math.exp %8 : vector<8x2xf32>
    %cst_4 = arith.constant dense<0.000000e+00> : vector<8xf32>
    %10 = vector.multi_reduction <add>, %9, %cst_4 [1] : vector<8x2xf32> to vector<8xf32>
    %11 = vector.shape_cast %10 : vector<8xf32> to vector<8x1xf32>
    %12 = tpu.reciprocal %11 : vector<8x1xf32> -> vector<8x1xf32>
    %13 = vector.broadcast %12 : vector<8x1xf32> to vector<8x2xf32>
    %14 = arith.mulf %9, %13 : vector<8x2xf32>
    %c0_5 = arith.constant 0 : index
    %c0_6 = arith.constant 0 : index
    %15 = vector.load %arg2[%c0_5, %c0_6] : memref<8x2xf32, #tpu.memory_space<vmem>>, vector<8x2xf32>
    tpu.vector_store %arg2[%c0_5, %c0_6], %14 {strides = array<i32>} : memref<8x2xf32, #tpu.memory_space<vmem>>, vector<8x2xf32>,
    %cst_7 = arith.constant dense<0.000000e+00> : vector<2xf32>
    %16 = vector.multi_reduction <add>, %14, %cst_7 [0] : vector<8x2xf32> to vector<2xf32>
    %17 = vector.shape_cast %16 : vector<2xf32> to vector<1x2xf32>
    %cst_8 = arith.constant 1.000000e+00 : f32
    %18 = vector.broadcast %cst_8 : f32 to vector<1x2xf32>
    %19 = arith.subf %18, %17 : vector<1x2xf32>
    %cst_9 = arith.constant 0.000000e+00 : f32
    %20 = vector.broadcast %cst_9 : f32 to vector<1x2xf32>
    %21 = arith.maximumf %19, %20 : vector<1x2xf32>
    %cst_10 = arith.constant 1.000000e+00 : f32
    %22 = vector.broadcast %cst_10 : f32 to vector<1x2xf32>
    %23 = arith.mulf %22, %21 : vector<1x2xf32>
    %c0_11 = arith.constant 0 : index
    %c0_12 = arith.constant 0 : index
    %24 = vector.load %arg3[%c0_11, %c0_12] : memref<1x2xf32, #tpu.memory_space<vmem>>, vector<1x2xf32>
    tpu.vector_store %arg3[%c0_11, %c0_12], %23 {strides = array<i32>} : memref<1x2xf32, #tpu.memory_space<vmem>>, vector<1x2xf32>,
    return
  }
}

</mosaic_0001>

<llo_original>
// kernel: tpu_custom_call.1
$region0: #{tpu_custom_call.1}
  #allocation0 [shape = 'u32[]', space=smem, size = 0x4, offset = 0x4, fixed_abs, tag = 'smem constant byte address 0x4 - core index']
  #allocation1 [shape = 'u32[72,128]{1,0:T(1,128)}', space=vmem, size = 0x9000, scoped, tag = 'internal scratch']
  %s0 = inlined_call_operand.vmem [shape: f32[8,2], index: 0, kind: input, shape index: {}]
  %s1 = inlined_call_operand.vmem [shape: f32[8,2], index: 1, kind: input, shape index: {}]
  %s2 = inlined_call_operand.vmem [shape: f32[8,2], index: 2, kind: output, shape index: {0}]
  %s3 = inlined_call_operand.hbm [shape: f32[1,2], index: 3, kind: output, shape index: {1}]
  %4 = xla_tuple %s2, %s3
  %s5 = sld [smem:[#allocation0]]
  $region26: #{tpu_custom_call.1} parent=0
    _
  %s7 = ssub.s32 1, %s5
  %s8 = scalar_select 0, %s7, %s5
  $region1: #{tpu_custom_call.1} parent=0
    #allocation2 [shape = 'u8[512]{0}', space=vmem, size = 0x400, scoped, tag = 'output window, operand 1, single buffered']
    #allocation3 [shape = 's32[1]{0}', space=sflag, size = 0x4, scoped, tag = 'scoped memory for tpu_custom_call.1']
    %9 = vsyncpa [#allocation3], 0
    // Predicated region
    $region2: #{tpu_custom_call.1} parent=1 // pred_check
      _
    $region3: #{tpu_custom_call.1} parent=1 // pred_check_branch
      %11 = sbr.rel (0) target = $region5
    $region4: #{tpu_custom_call.1} parent=1 // pred_region
      _
    $region5: #{tpu_custom_call.1} parent=1 // pred_fallthru
      _
    // Predicated region
    $region6: #{tpu_custom_call.1} parent=1 // pred_check
      _
    $region7: #{tpu_custom_call.1} parent=1 // pred_check_branch
      %13 = sbr.rel (0) target = $region9
    $region8: #{tpu_custom_call.1} parent=1 // pred_region
      _
    $region9: #{tpu_custom_call.1} parent=1 // pred_fallthru
      _
    %v14 = vld [vmem:[%s0] sm:$0xff]
    %v15 = vld [vmem:[%s1] sm:$0xff]
    %v16 = vadd.f32 %v14, %v15
    %vm17 = vcmask 15360
    %v18 = vsel %vm17, %v16, -inf
    %19 = vmax.xlane.f32.xlu0 %v18
    %v20 = vpop.xlane.xlu0 %19
    %v21 = vsub.f32 %v16, %v20
    %v22 = vmul.f32 %v21, 1.442695
    %v23 = vpow.pop %v22
    %v24 = vsel %vm17, %v23, 0.0
    %25 = vadd.xlane.f32.xlu0 %v24
    %v26 = vpop.xlane.xlu0 %25
    %v27 = vrcp.pop %v26
    %v28 = vmul.f32 %v26, %v27
    %v29 = vsub.f32 1.0, %v28
    %v30 = vmul.f32 %v27, %v29
    %v31 = vadd.f32 %v27, %v30
    %vm32 = vweird.f32 %v26
    %vm33 = vweird.f32 %v27
    %vm34 = vmor %vm32, %vm33
    %v35 = vsel %vm34, %v27, %v31
    %v36 = vand.u32 2147483647, %v26
    %vm37 = vcmp.eq.f32.partialorder %v36, 8.507059e+37
    %v38 = vand.u32 %v26, 2147483648
    %v39 = vor.u32 1.1754944e-38, %v38
    %v40 = vsel %vm37, %v39, %v35
    %v41 = vmul.f32 %v23, %v40
    %42 = vst.msk [vmem:[%s2] sm:$0xff] %vm17, %v41
    %v43 = vsel %vm17, %v41, 0.0
    %v44 = vrot.slane %v43, 4
    %v45 = vadd.f32 %v43, %v44
    %v46 = vrot.slane %v45, 2
    %v47 = vadd.f32 %v45, %v46
    %v48 = vrot.slane %v47, 1
    %v49 = vadd.f32 %v47, %v48
    %v50 = vsub.f32 1.0, %v49
    %v51 = vmax.f32 %v50, 0.0
    %vm52 = vcmask 8192
    %53 = vst.msk [vmem:[#allocation2] sm:$0x1] %vm52, %v51
    // Predicated region
    $region10: #{tpu_custom_call.1} parent=1 // pred_check
      _
    $region11: #{tpu_custom_call.1} parent=1 // pred_check_branch
      %55 = sbr.rel (0) target = $region13
    $region12: #{tpu_custom_call.1} parent=1 // pred_region
      _
    $region13: #{tpu_custom_call.1} parent=1 // pred_fallthru
      _
    // Predicated region
    $region14: #{tpu_custom_call.1} parent=1 // pred_check
      _
    $region15: #{tpu_custom_call.1} parent=1 // pred_check_branch
      %57 = sbr.rel (0) target = $region17
    $region16: #{tpu_custom_call.1} parent=1 // pred_region
      %59 = vsyncadd [#allocation3], 0
      %s61 = sshll.u32 [#allocation2], 4
      %s62 = int_to_ptr.vmem [resolvable:$true] %s61
      %s63 = sshll.u32 %s3, 4
      %s64 = int_to_ptr.hbm [resolvable:$true] %s63
      %66 = dma.vmem_to_hbm [thread:$0]  %s62, 16, %s64, [#allocation3]
    $region17: #{tpu_custom_call.1} parent=1 // pred_fallthru
      _
    // Predicated region
    $region18: #{tpu_custom_call.1} parent=1 // pred_check
      _
    $region19: #{tpu_custom_call.1} parent=1 // pred_check_branch
      %68 = sbr.rel (0) target = $region21
    $region20: #{tpu_custom_call.1} parent=1 // pred_region
      _
    $region21: #{tpu_custom_call.1} parent=1 // pred_fallthru
      _
    // Predicated region
    $region22: #{tpu_custom_call.1} parent=1 // pred_check
      _
    $region23: #{tpu_custom_call.1} parent=1 // pred_check_branch
      %70 = sbr.rel (0) target = $region25
    $region24: #{tpu_custom_call.1} parent=1 // pred_region
      %72 = dma.done [#allocation3], 16
    $region25: #{tpu_custom_call.1} parent=1 // pred_fallthru
      _
    %73 = vsyncpa [#allocation3], 1

</llo_original>
